<compile_context>
chip_gen: v6e
topology: v6e:2x2x1
jax: 0.10.0
libtpu: 0.0.40
codegen_flags: <defaults>
</compile_context>

<pallas_src>
import functools

import jax
import jax.numpy as jnp
from jax.experimental import pallas as pl
from jax.experimental.pallas import tpu as pltpu

LANES = 128
SUBLANES = 8
VREG_ELEMS = SUBLANES * LANES  # 1024 f32 elements per vreg


def linear_kernel(x_ref, wb_ref, o_ref):
    # y = x * w + b  -- pure VPU elementwise FMA; w/b are SMEM scalars.
    w = wb_ref[0]
    b = wb_ref[1]
    o_ref[...] = (x_ref[...] * w + b).astype(o_ref.dtype)


@functools.partial(jax.jit, static_argnames=())
def my_linear(x, weight, bias):
    """Pallas implementation of nn.Linear(1, 1) forward: y = x @ W^T + b."""
    n, in_f = x.shape
    out_f = weight.shape[0]
    assert in_f == 1 and out_f == 1, "kernel specialized for nn.Linear(1, 1)"

    # Lane/sublane-dense layout: pad rows to a multiple of 8*128 so the slab
    # is an exact number of full (8, 128) vregs (no masked loads/stores).
    n_pad = ((n + VREG_ELEMS - 1) // VREG_ELEMS) * VREG_ELEMS
    rows = n_pad // LANES
    x_dense = jnp.pad(x, ((0, n_pad - n), (0, 0))).reshape(rows, LANES)

    # Pack weight & bias into a single (2,) SMEM scalar ref.
    wb = jnp.concatenate(
        [weight.reshape(1).astype(jnp.float32),
         bias.reshape(1).astype(jnp.float32)])

    out_dense = pl.pallas_call(
        linear_kernel,
        out_shape=jax.ShapeDtypeStruct((rows, LANES), x.dtype),
        in_specs=[
            pl.BlockSpec(memory_space=pltpu.MemorySpace.VMEM),   # x slab
            pl.BlockSpec(memory_space=pltpu.MemorySpace.SMEM),   # [w, b] scalars
        ],
        out_specs=pl.BlockSpec(memory_space=pltpu.MemorySpace.VMEM),
    )(x_dense, wb)

    # Undo the lane-dense packing and drop the padded rows.
    return out_dense.reshape(n_pad, 1)[:n, :]


if __name__ == "__main__":
    key = jax.random.PRNGKey(0)
    kx, kw, kb = jax.random.split(key, 3)

    # Input matches the script: x = torch.rand([500, 1])
    x = jax.random.uniform(kx, (500, 1), dtype=jnp.float32)

    # Deterministic nn.Linear(1, 1) init: U(-1/sqrt(in_features), 1/sqrt(in_features))
    in_features, out_features = 1, 1
    bound = 1.0 / (in_features ** 0.5)
    weight = jax.random.uniform(
        kw, (out_features, in_features), dtype=jnp.float32,
        minval=-bound, maxval=bound)
    bias = jax.random.uniform(
        kb, (out_features,), dtype=jnp.float32, minval=-bound, maxval=bound)

    out = my_linear(x, weight, bias)
    jax.block_until_ready(out)

    # Sanity check against the plain-JAX reference.
    ref = x @ weight.T + bias
    assert out.shape == (500, 1)
    assert jnp.allclose(out, ref, atol=1e-5, rtol=1e-5)

    print("KERNEL_OK")
</pallas_src>

<mosaic_0001>
module attributes {stable_mosaic.version = 11 : i64} {
  func.func @linear_kernel(%arg0: memref<8x128xf32, #tpu.memory_space<vmem>>, %arg1: memref<2xf32, #tpu.memory_space<smem>>, %arg2: memref<8x128xf32, #tpu.memory_space<vmem>>) attributes {dimension_semantics = [], scalar_prefetch = 0 : i64, scratch_operands = 0 : i64, tpu.core_type = #tpu.core_type<tc>} {
    %c0 = arith.constant 0 : index
    %0 = memref.load %arg1[%c0] : memref<2xf32, #tpu.memory_space<smem>>
    %c1 = arith.constant 1 : index
    %1 = memref.load %arg1[%c1] : memref<2xf32, #tpu.memory_space<smem>>
    %c0_0 = arith.constant 0 : index
    %c0_1 = arith.constant 0 : index
    %2 = vector.load %arg0[%c0_0, %c0_1] : memref<8x128xf32, #tpu.memory_space<vmem>>, vector<8x128xf32>
    %3 = vector.broadcast %0 : f32 to vector<8x128xf32>
    %4 = arith.mulf %2, %3 : vector<8x128xf32>
    %5 = vector.broadcast %1 : f32 to vector<8x128xf32>
    %6 = arith.addf %4, %5 : vector<8x128xf32>
    %c0_2 = arith.constant 0 : index
    %c0_3 = arith.constant 0 : index
    %7 = vector.load %arg2[%c0_2, %c0_3] : memref<8x128xf32, #tpu.memory_space<vmem>>, vector<8x128xf32>
    tpu.vector_store %arg2[%c0_2, %c0_3], %6 {strides = array<i32>} : memref<8x128xf32, #tpu.memory_space<vmem>>, vector<8x128xf32>,
    return
  }
}

</mosaic_0001>

<llo_original>
// kernel: my_linear.1
$region0: #{my_linear.1}
  #allocation0 [shape = 'u32[]', space=smem, size = 0x4, offset = 0x4, fixed_abs, tag = 'smem constant byte address 0x4 - core index']
  #allocation1 [shape = 'u32[144,128]{1,0:T(1,128)}', space=vmem, size = 0x12000, scoped, tag = 'internal scratch']
  %s0 = inlined_call_operand.vmem [shape: f32[8,128], index: 0, kind: input, shape index: {}]
  %s1 = inlined_call_operand.vmem [shape: f32[2], index: 1, kind: input, shape index: {}]
  %s2 = inlined_call_operand.vmem [shape: f32[8,128], index: 2, kind: output, shape index: {}]
  %s3 = sld [smem:[#allocation0]]
  $region22: #{my_linear.1} parent=0
    _
  %s5 = ssub.s32 1, %s3
  %s6 = scalar_select 0, %s5, %s3
  $region1: #{my_linear.1} parent=0
    #allocation2 [shape = 'u8[512]{0}', space=smem, size = 0x200, scoped, tag = 'input window, operand 1, single buffered']
    #allocation3 [shape = 's32[1]{0}', space=sflag, size = 0x4, scoped, tag = 'scoped memory for my_linear.1']
    %7 = vsyncpa [#allocation3], 0
    // Predicated region
    $region2: #{my_linear.1} parent=1 // pred_check
      _
    $region3: #{my_linear.1} parent=1 // pred_check_branch
      %9 = sbr.rel (0) target = $region5
    $region4: #{my_linear.1} parent=1 // pred_region
      _
    $region5: #{my_linear.1} parent=1 // pred_fallthru
      _
    // Predicated region
    $region6: #{my_linear.1} parent=1 // pred_check
      _
    $region7: #{my_linear.1} parent=1 // pred_check_branch
      %11 = sbr.rel (0) target = $region9
    $region8: #{my_linear.1} parent=1 // pred_region
      %s13 = ssub.s32 16, 16
      %14 = vsyncadd [#allocation3], %s13
      %s16 = sshll.u32 %s1, 4
      %s17 = int_to_ptr.vmem [resolvable:$true] %s16
      %19 = dma.vmem_to_smem %s17, 16, [#allocation2], [#allocation3]
    $region9: #{my_linear.1} parent=1 // pred_fallthru
      _
    // Predicated region
    $region10: #{my_linear.1} parent=1 // pred_check
      _
    $region11: #{my_linear.1} parent=1 // pred_check_branch
      %21 = sbr.rel (0) target = $region13
    $region12: #{my_linear.1} parent=1 // pred_region
      %22 = dma.done [#allocation3], 16
    $region13: #{my_linear.1} parent=1 // pred_fallthru
      _
    %23 = sfence
    %s24 = sld [smem:[#allocation2]]
    %s25 = sld [smem:[#allocation2 + $0x1]]
    %v26 = vld [vmem:[%s0] sm:$0xff]
    %v27 = vstv %s24
    %v28 = vmul.f32 %v26, %v27
    %v29 = vstv %s25
    %v30 = vadd.f32 %v28, %v29
    %31 = vst [vmem:[%s2] sm:$0xff] %v30
    // Predicated region
    $region14: #{my_linear.1} parent=1 // pred_check
      _
    $region15: #{my_linear.1} parent=1 // pred_check_branch
      %33 = sbr.rel (0) target = $region17
    $region16: #{my_linear.1} parent=1 // pred_region
      _
    $region17: #{my_linear.1} parent=1 // pred_fallthru
      _
    // Predicated region
    $region18: #{my_linear.1} parent=1 // pred_check
      _
    $region19: #{my_linear.1} parent=1 // pred_check_branch
      %35 = sbr.rel (0) target = $region21
    $region20: #{my_linear.1} parent=1 // pred_region
      _
    $region21: #{my_linear.1} parent=1 // pred_fallthru
      _
    %36 = vsyncpa [#allocation3], 1

</llo_original>
